<compile_context>
chip_gen: v7x
topology: tpu7x:2x2x1
jax: 0.10.0
libtpu: 0.0.40
codegen_flags: <defaults>
</compile_context>

<pallas_src>
import jax
import jax.numpy as jnp
from jax import lax
from jax.experimental import pallas as pl
from jax.experimental.pallas import tpu as pltpu


def word2vec_kernel(x_ref, w1_ref, w2_ref, o_ref, h_ref):
    """Computes one (tb, tn) output tile.

    x_ref : (tb, V)  input batch tile (compute dtype, e.g. bf16)
    w1_ref: (E, V)   W.weight (nn.Linear layout), held across the grid
    w2_ref: (tn, E)  WT.weight slice over the output-vocab axis
    o_ref : (tb, tn) output logits tile
    h_ref : (tb, E)  VMEM scratch: hidden layer for the current batch tile
    """
    j = pl.program_id(1)

    # hidden = X @ W.weight.T  -- computed once per batch tile, reused for every j.
    @pl.when(j == 0)
    def _():
        h_ref[...] = lax.dot_general(
            x_ref[...], w1_ref[...],
            dimension_numbers=(((1,), (1,)), ((), ())),  # contract over V
            preferred_element_type=jnp.float32,
        ).astype(h_ref.dtype)

    # out[:, j*tn:(j+1)*tn] = hidden @ WT.weight[j*tn:(j+1)*tn, :].T
    o_ref[...] = lax.dot_general(
        h_ref[...], w2_ref[...],
        dimension_numbers=(((1,), (1,)), ((), ())),      # contract over E
        preferred_element_type=jnp.float32,
    ).astype(o_ref.dtype)


def _round_up(x, m):
    return (x + m - 1) // m * m


def _pick_vocab_tile(v, pref=1024):
    """Largest multiple of 128 that divides V and is <= pref; else V itself."""
    if v <= pref:
        return v
    for t in range(pref - pref % 128, 0, -128):
        if v % t == 0:
            return t
    return v


def word2vec_forward(x, w_weight, wt_weight, *, tb=None, tn=None,
                     compute_dtype=jnp.bfloat16):
    """x: [B, V]; w_weight: [E, V]; wt_weight: [V, E] (native nn.Linear layouts)."""
    B, V = x.shape
    E, V2 = w_weight.shape
    assert V2 == V and wt_weight.shape == (V, E)
    out_dtype = x.dtype

    if tb is None:
        tb = min(256, _round_up(B, 16))   # bf16 sublane packing wants multiples of 16
    if tn is None:
        tn = _pick_vocab_tile(V)
    assert V % tn == 0, (V, tn)

    # bf16 compute dtype (f32 accumulation inside the kernel). In a real model the
    # parameters would be stored in this dtype once, outside the per-step hot path.
    xc = x.astype(compute_dtype)
    w1 = w_weight.astype(compute_dtype)
    w2 = wt_weight.astype(compute_dtype)

    # Pad the batch up to a tile multiple so arbitrary B works.
    Bp = _round_up(B, tb)
    if Bp != B:
        xc = jnp.pad(xc, ((0, Bp - B), (0, 0)))

    grid = (Bp // tb, V // tn)

    csize = jnp.dtype(compute_dtype).itemsize
    osize = jnp.dtype(out_dtype).itemsize
    # Double-buffered streamed tiles + resident W1 + hidden scratch, with margin.
    vmem_bytes = (
        2 * (tb * V + tn * E) * csize      # X tile + WT tile (double buffered)
        + 2 * E * V * csize                # W.weight held across the grid
        + 2 * tb * tn * osize              # output tile (double buffered)
        + tb * E * csize                   # hidden scratch
    )
    vmem_limit = min(max(2 * vmem_bytes + (4 << 20), 16 << 20), 48 << 20)

    cost = pl.CostEstimate(
        flops=2 * Bp * V * E + 2 * Bp * E * V,
        transcendentals=0,
        bytes_accessed=(Bp * V + E * V + V * E) * csize + Bp * V * osize,
    )

    out = pl.pallas_call(
        word2vec_kernel,
        out_shape=jax.ShapeDtypeStruct((Bp, V), out_dtype),
        grid_spec=pltpu.PrefetchScalarGridSpec(
            num_scalar_prefetch=0,
            grid=grid,
            in_specs=[
                pl.BlockSpec((tb, V), lambda i, j: (i, 0)),   # X batch tile (reused over j)
                pl.BlockSpec((E, V), lambda i, j: (0, 0)),    # W.weight, resident
                pl.BlockSpec((tn, E), lambda i, j: (j, 0)),   # WT.weight streamed over vocab
            ],
            out_specs=pl.BlockSpec((tb, tn), lambda i, j: (i, j)),
            scratch_shapes=[pltpu.VMEM((tb, E), compute_dtype)],
        ),
        compiler_params=pltpu.CompilerParams(
            dimension_semantics=("parallel", "arbitrary"),
            vmem_limit_bytes=int(vmem_limit),
        ),
        cost_estimate=cost,
    )(xc, w1, w2)

    if Bp != B:
        out = out[:B]
    return out


if __name__ == "__main__":
    # Small shapes consistent with the module: vocab_size=512, emb_size=128, batch=32.
    # tb=16, tn=256 -> grid (2, 2): exercises both the batch tiling and the
    # hidden-scratch reuse across output-vocab tiles.
    B, VOCAB, EMB = 32, 512, 128

    key = jax.random.PRNGKey(0)
    kx, kw, kwt = jax.random.split(key, 3)

    x = jax.random.normal(kx, (B, VOCAB), dtype=jnp.float32)
    w_weight = jax.random.normal(kw, (EMB, VOCAB), dtype=jnp.float32) * 0.02   # W.weight
    wt_weight = jax.random.normal(kwt, (VOCAB, EMB), dtype=jnp.float32) * 0.02  # WT.weight

    out = word2vec_forward(x, w_weight, wt_weight, tb=16, tn=256)
    out = jax.block_until_ready(out)

    # Reference (plain JAX f32), mirrors the PyTorch forward exactly.
    ref = (x @ w_weight.T) @ wt_weight.T
    assert out.shape == (B, VOCAB)
    # bf16 matmul inputs with f32 accumulation -> compare at bf16-level tolerance.
    err = float(jnp.max(jnp.abs(out - ref)))
    assert jnp.allclose(out, ref, atol=1e-2, rtol=2e-2), err

    print("KERNEL_OK")
</pallas_src>

<mosaic_0001>
module attributes {stable_mosaic.version = 11 : i64} {
  func.func @word2vec_kernel(%arg0: i32, %arg1: i32, %arg2: memref<16x512xbf16, #tpu.memory_space<vmem>>, %arg3: memref<128x512xbf16, #tpu.memory_space<vmem>>, %arg4: memref<256x128xbf16, #tpu.memory_space<vmem>>, %arg5: memref<16x256xf32, #tpu.memory_space<vmem>>, %arg6: memref<16x128xbf16, #tpu.memory_space<vmem>>) attributes {dimension_semantics = [#tpu.dimension_semantics<parallel>, #tpu.dimension_semantics<arbitrary>], iteration_bounds = array<i64: 2, 2>, scalar_prefetch = 0 : i64, scratch_operands = 1 : i64, tpu.core_type = #tpu.core_type<tc>, window_params = [{transform_indices = @transform_0, window_bounds = array<i64: 16, 512>}, {pipeline_mode = #tpu.pipeline_mode<synchronous>, transform_indices = @transform_1, window_bounds = array<i64: 128, 512>}, {transform_indices = @transform_2, window_bounds = array<i64: 256, 128>}, {transform_indices = @transform_3, window_bounds = array<i64: 16, 256>}]} {
    %c0_i32 = arith.constant 0 : i32
    %0 = arith.cmpi eq, %arg1, %c0_i32 : i32
    %1 = arith.extui %0 : i1 to i32
    %c0_i32_0 = arith.constant 0 : i32
    %2 = arith.cmpi ne, %1, %c0_i32_0 : i32
    scf.if %2 {
      %c0_6 = arith.constant 0 : index
      %c0_7 = arith.constant 0 : index
      %7 = vector.load %arg2[%c0_6, %c0_7] : memref<16x512xbf16, #tpu.memory_space<vmem>>, vector<16x512xbf16>
      %c0_8 = arith.constant 0 : index
      %c0_9 = arith.constant 0 : index
      %8 = vector.load %arg3[%c0_8, %c0_9] : memref<128x512xbf16, #tpu.memory_space<vmem>>, vector<128x512xbf16>
      %cst_10 = arith.constant dense<0.000000e+00> : vector<16x128xf32>
      %9 = tpu.matmul %7, %8, %cst_10 {dimension_numbers = #tpu.dot_dimension_numbers<[1], [1], [0], [0], [0, 0, 1, 0], [], []>} : vector<16x512xbf16>, vector<128x512xbf16>, vector<16x128xf32> -> vector<16x128xf32>
      %10 = arith.truncf %9 : vector<16x128xf32> to vector<16x128xbf16>
      %c0_11 = arith.constant 0 : index
      %c0_12 = arith.constant 0 : index
      %11 = vector.load %arg6[%c0_11, %c0_12] : memref<16x128xbf16, #tpu.memory_space<vmem>>, vector<16x128xbf16>
      tpu.vector_store %arg6[%c0_11, %c0_12], %10 {strides = array<i32>} : memref<16x128xbf16, #tpu.memory_space<vmem>>, vector<16x128xbf16>,
    } else {
    }
    %c0 = arith.constant 0 : index
    %c0_1 = arith.constant 0 : index
    %3 = vector.load %arg6[%c0, %c0_1] : memref<16x128xbf16, #tpu.memory_space<vmem>>, vector<16x128xbf16>
    %c0_2 = arith.constant 0 : index
    %c0_3 = arith.constant 0 : index
    %4 = vector.load %arg4[%c0_2, %c0_3] : memref<256x128xbf16, #tpu.memory_space<vmem>>, vector<256x128xbf16>
    %cst = arith.constant dense<0.000000e+00> : vector<16x256xf32>
    %5 = tpu.matmul %3, %4, %cst {dimension_numbers = #tpu.dot_dimension_numbers<[1], [1], [0], [0], [0, 0, 1, 0], [], []>} : vector<16x128xbf16>, vector<256x128xbf16>, vector<16x256xf32> -> vector<16x256xf32>
    %c0_4 = arith.constant 0 : index
    %c0_5 = arith.constant 0 : index
    %6 = vector.load %arg5[%c0_4, %c0_5] : memref<16x256xf32, #tpu.memory_space<vmem>>, vector<16x256xf32>
    tpu.vector_store %arg5[%c0_4, %c0_5], %5 {strides = array<i32>} : memref<16x256xf32, #tpu.memory_space<vmem>>, vector<16x256xf32>,
    return
  }
  func.func @transform_0(%arg0: i32, %arg1: i32) -> (i32, i32) {
    %c0_i32 = arith.constant 0 : i32
    %c0_i32_0 = arith.constant 0 : i32
    return %arg0, %c0_i32 : i32, i32
  }
  func.func @transform_1(%arg0: i32, %arg1: i32) -> (i32, i32) {
    %c0_i32 = arith.constant 0 : i32
    %c0_i32_0 = arith.constant 0 : i32
    %c0_i32_1 = arith.constant 0 : i32
    return %c0_i32, %c0_i32_0 : i32, i32
  }
  func.func @transform_2(%arg0: i32, %arg1: i32) -> (i32, i32) {
    %c0_i32 = arith.constant 0 : i32
    %c0_i32_0 = arith.constant 0 : i32
    return %arg1, %c0_i32 : i32, i32
  }
  func.func @transform_3(%arg0: i32, %arg1: i32) -> (i32, i32) {
    %c0_i32 = arith.constant 0 : i32
    return %arg0, %arg1 : i32, i32
  }
}

</mosaic_0001>

<llo_original>
// kernel: tpu_custom_call.1
$region0: #{tpu_custom_call.1}
  #allocation0 [shape = 'u32[]', space=smem, size = 0x4, offset = 0x4, fixed_abs, tag = 'smem constant byte address 0x4 - core index']
  #allocation1 [shape = 'u32[144,128]{1,0:T(1,128)}', space=vmem, size = 0x12000, scoped, tag = 'internal scratch']
  #allocation2 [shape = 'bf16[16,128]{1,0:T(16,128)(2,1)}', space=vmem, size = 0x1000, scoped, tag = 'scratch operand']
  %s0 = inlined_call_operand.hbm [shape: bf16[32,512], index: 0, kind: input, shape index: {}]
  %s1 = inlined_call_operand.hbm [shape: bf16[128,512], index: 1, kind: input, shape index: {}]
  %s2 = inlined_call_operand.hbm [shape: bf16[512,128], index: 2, kind: input, shape index: {}]
  %s3 = inlined_call_operand.hbm [shape: f32[32,512], index: 3, kind: output, shape index: {}]
  %s4 = sld [smem:[#allocation0]]
  $region61: #{tpu_custom_call.1} parent=0
    _
  %s6 = ssub.s32 1, %s4
  %s7 = scalar_select 0, %s6, %s4
  $region1: #{tpu_custom_call.1} parent=0
    #allocation3 [shape = 'u8[32768]{0}', space=vmem, size = 0x8000, scoped, tag = 'input window, operand 0']
    #allocation4 [shape = 's32[2]{0}', space=sflag, size = 0x8, scoped, tag = 'scoped memory for tpu_custom_call.1']
    #allocation5 [shape = 's32[2]{0}', space=sflag, size = 0x8, scoped, tag = 'scoped memory for tpu_custom_call.1']
    #allocation6 [shape = 'u8[131072]{0}', space=vmem, size = 0x20000, scoped, tag = 'input window, operand 1, single buffered']
    #allocation7 [shape = 's32[1]{0}', space=sflag, size = 0x4, scoped, tag = 'scoped memory for tpu_custom_call.1']
    #allocation8 [shape = 'u8[131072]{0}', space=vmem, size = 0x20000, scoped, tag = 'input window, operand 2']
    #allocation9 [shape = 'u8[32768]{0}', space=vmem, size = 0x8000, scoped, tag = 'output window, operand 0']
    %8 = vsyncpa [#allocation4], 0
    %s9 = scalar_lea.sflag [#allocation4], 1
    %10 = vsyncpa %s9, 0
    %11 = vsyncpa [#allocation7], 0
    %12 = vsyncpa [#allocation5], 0
    %s13 = scalar_lea.sflag [#allocation5], 1
    %14 = vsyncpa %s13, 0
    loop: start=0, step=1, limit=6
    $region2: #{tpu_custom_call.1} parent=1 // loop_pre_header
      _
    $region3: #{tpu_custom_call.1} parent=1 // loop_header
      %s16 = sphi 0, %s20
      %p17 = scmp.ge.s32.totalorder %s16, 6
      %s23 = sphi 0, %s35
      %s24 = sphi 0, %s31
      %s25 = sphi 0, %s23
      %s26 = sphi 0, %s24
      %s27 = sphi 0, %s25
      %s28 = sphi 0, %s26
      %s38 = sphi 0, %s40
      %s41 = sphi 0, %s38
      %s42 = sphi 0, %s41
      %s58 = sphi 0, %s42
      %s62 = sphi 0, %s62
      %s64 = sphi 0, %s62
      %s65 = sphi 0, %s64
      %s79 = sphi 0, %s65
      %s85 = sphi 0, %s87
      %s88 = sphi 0, %s85
      %s89 = sphi 0, %s88
      %s105 = sphi 0, %s89
      %s113 = sphi 0, %s115
      %s116 = sphi 0, %s113
      %s117 = sphi 0, %s116
      %s133 = sphi 0, %s117
    $region4: #{tpu_custom_call.1} parent=1 // loop_header_branch
      %19 = sbr.rel (%p17) target = $region8
    $region5: #{tpu_custom_call.1} parent=1 // loop_body
      %s21 = ssub.s32 %s16, 1
      %s22 = ssub.s32 %s16, 2
      %s29 = sadd.s32 1, %s24
      %p30 = scmp.ge.s32.totalorder %s29, 2
      %s31 = scalar_select %p30, 0, %s29
      %s32 = sadd.s32 1, %s23
      %s33 = scalar_select %p30, %s32, %s23
      %p34 = scmp.ge.s32.totalorder %s33, 2
      %s35 = scalar_select %p34, 0, %s33
      %s36 = ssub.s32 %s23, %s35
      %p37 = scmp.eq.s32.totalorder %s36, 0
      %s39 = sadd.s32 %s38, 1
      %s40 = scalar_select %p37, %s38, %s39
      %p43 = pneg %p37
      %p44 = scmp.eq.s32.totalorder %s16, 3
      %p45 = por %p43, %p44
      %p46 = scmp.ne.s32.totalorder %s38, %s41
      %p47 = scmp.eq.s32.totalorder %s16, 0
      %p48 = por %p46, %p47
      %p49 = scmp.ne.s32.totalorder %s38, %s41
      %p50 = scmp.eq.s32.totalorder %s21, 3
      %p51 = por %p49, %p50
      %p52 = scmp.ne.s32.totalorder %s41, %s42
      %p53 = scmp.eq.s32.totalorder %s21, 0
      %p54 = por %p52, %p53
      %p55 = scmp.ne.s32.totalorder %s41, %s42
      %p56 = scmp.eq.s32.totalorder %s22, 3
      %p57 = por %p55, %p56
      %p59 = scmp.ne.s32.totalorder %s42, %s58
      %p60 = scmp.eq.s32.totalorder %s22, 0
      %p61 = por %p59, %p60
      %s63 = sadd.s32 %s62, 1
      %p66 = scmp.eq.s32.totalorder %s16, 3
      %p67 = scmp.ne.s32.totalorder %s62, %s64
      %p68 = scmp.eq.s32.totalorder %s16, 0
      %p69 = por %p67, %p68
      %p70 = scmp.ne.s32.totalorder %s62, %s64
      %p71 = scmp.eq.s32.totalorder %s21, 3
      %p72 = por %p70, %p71
      %p73 = scmp.ne.s32.totalorder %s64, %s65
      %p74 = scmp.eq.s32.totalorder %s21, 0
      %p75 = por %p73, %p74
      %p76 = scmp.ne.s32.totalorder %s64, %s65
      %p77 = scmp.eq.s32.totalorder %s22, 3
      %p78 = por %p76, %p77
      %p80 = scmp.ne.s32.totalorder %s65, %s79
      %p81 = scmp.eq.s32.totalorder %s22, 0
      %p82 = por %p80, %p81
      %s83 = ssub.s32 %s24, %s31
      %p84 = scmp.eq.s32.totalorder %s83, 0
      %s86 = sadd.s32 %s85, 1
      %s87 = scalar_select %p84, %s85, %s86
      %p90 = pneg %p84
      %p91 = scmp.eq.s32.totalorder %s16, 3
      %p92 = por %p90, %p91
      %p93 = scmp.ne.s32.totalorder %s85, %s88
      %p94 = scmp.eq.s32.totalorder %s16, 0
      %p95 = por %p93, %p94
      %p96 = scmp.ne.s32.totalorder %s85, %s88
      %p97 = scmp.eq.s32.totalorder %s21, 3
      %p98 = por %p96, %p97
      %p99 = scmp.ne.s32.totalorder %s88, %s89
      %p100 = scmp.eq.s32.totalorder %s21, 0
      %p101 = por %p99, %p100
      %p102 = scmp.ne.s32.totalorder %s88, %s89
      %p103 = scmp.eq.s32.totalorder %s22, 3
      %p104 = por %p102, %p103
      %p106 = scmp.ne.s32.totalorder %s89, %s105
      %p107 = scmp.eq.s32.totalorder %s22, 0
      %p108 = por %p106, %p107
      %s109 = ssub.s32 %s23, %s35
      %s110 = ssub.s32 %s24, %s31
      %s111 = sor.u32 %s109, %s110
      %p112 = scmp.eq.s32.totalorder %s111, 0
      %s114 = sadd.s32 %s113, 1
      %s115 = scalar_select %p112, %s113, %s114
      %p118 = pneg %p112
      %p119 = scmp.eq.s32.totalorder %s16, 3
      %p120 = por %p118, %p119
      %p121 = scmp.ne.s32.totalorder %s113, %s116
      %p122 = scmp.eq.s32.totalorder %s16, 0
      %p123 = por %p121, %p122
      %p124 = scmp.ne.s32.totalorder %s113, %s116
      %p125 = scmp.eq.s32.totalorder %s21, 3
      %p126 = por %p124, %p125
      %p127 = scmp.ne.s32.totalorder %s116, %s117
      %p128 = scmp.eq.s32.totalorder %s21, 0
      %p129 = por %p127, %p128
      %p130 = scmp.ne.s32.totalorder %s116, %s117
      %p131 = scmp.eq.s32.totalorder %s22, 3
      %p132 = por %p130, %p131
      %p134 = scmp.ne.s32.totalorder %s117, %s133
      %p135 = scmp.eq.s32.totalorder %s22, 0
      %p136 = por %p134, %p135
      %p137 = scmp.le.s32.totalorder 1, %s16
      %p138 = scmp.lt.s32.totalorder %s16, 5
      %p139 = pnand %p137, %p138
      %p140 = pneg %p139
      // Predicated region
      $region9: #{tpu_custom_call.1} parent=5 // pred_check
        _
      $region10: #{tpu_custom_call.1} parent=5 // pred_check_branch
        %142 = sbr.rel (%p139) target = $region12
      $region11: #{tpu_custom_call.1} parent=5 // pred_region
        %s143 = ssub.s32 %s16, 1
        // Predicated region
        $region13: #{tpu_custom_call.1} parent=11 // pred_check
          %p144 = pneg %p75
        $region14: #{tpu_custom_call.1} parent=11 // pred_check_branch
          %146 = sbr.rel (%p144) target = $region16
        $region15: #{tpu_custom_call.1} parent=11 // pred_region
          %s148 = ssub.s32 4096, 4096
          %149 = vsyncadd [#allocation7], %s148
          %s150 = sshll.u32 [#allocation6], 4
          %s151 = int_to_ptr.vmem [resolvable:$true] %s150
          %156 = dma.hbm_to_vmem [thread:$0]  %s1, 4096, %s151, [#allocation7], 256, 256, 16
        $region16: #{tpu_custom_call.1} parent=11 // pred_fallthru
          _
      $region12: #{tpu_custom_call.1} parent=5 // pred_fallthru
        _
      %p157 = scmp.lt.s32.totalorder %s16, 4
      // Predicated region
      $region17: #{tpu_custom_call.1} parent=5 // pred_check
        %p158 = pneg %p157
      $region18: #{tpu_custom_call.1} parent=5 // pred_check_branch
        %160 = sbr.rel (%p158) target = $region20
      $region19: #{tpu_custom_call.1} parent=5 // pred_region
        // Predicated region
        $region21: #{tpu_custom_call.1} parent=19 // pred_check
          %p161 = pneg %p48
        $region22: #{tpu_custom_call.1} parent=19 // pred_check_branch
          %163 = sbr.rel (%p161) target = $region24
        $region23: #{tpu_custom_call.1} parent=19 // pred_region
          %s164 = sand.u32 %s16, 1
          %s165 = scalar_lea.sflag [#allocation4], %s164
          %s166 = sand.u32 %s38, 1
          %s167 = smul.addr %s166, 32
          %s168 = scalar_lea.vmem [#allocation3], %s167
          %s169 = smul.u32 2, %s23
          %s171 = ssub.s32 512, 512
          %172 = vsyncadd %s165, %s171
          %s173 = smul.addr %s169, 4
          %s174 = smul.addr %s173, 64
          %s175 = scalar_lea.hbm %s0, %s174
          %s176 = sshll.u32 %s168, 4
          %s177 = int_to_ptr.vmem [resolvable:$true] %s176
          %182 = dma.hbm_to_vmem [thread:$0]  %s175, 512, %s177, %s165, 256, 256, 16
        $region24: #{tpu_custom_call.1} parent=19 // pred_fallthru
          _
        // Predicated region
        $region25: #{tpu_custom_call.1} parent=19 // pred_check
          %p183 = pneg %p95
        $region26: #{tpu_custom_call.1} parent=19 // pred_check_branch
          %185 = sbr.rel (%p183) target = $region28
        $region27: #{tpu_custom_call.1} parent=19 // pred_region
          %s186 = sand.u32 %s16, 1
          %s187 = scalar_lea.sflag [#allocation4], %s186
          %s188 = sand.u32 %s85, 1
          %s189 = smul.addr %s188, 128
          %s190 = scalar_lea.vmem [#allocation8], %s189
          %s191 = smul.u32 32, %s24
          %s193 = ssub.s32 2048, 2048
          %194 = vsyncadd %s187, %s193
          %s195 = smul.addr %s191, 64
          %s196 = scalar_lea.hbm %s2, %s195
          %s197 = sshll.u32 %s190, 4
          %s198 = int_to_ptr.vmem [resolvable:$true] %s197
          %203 = dma.hbm_to_vmem [thread:$0]  %s196, 2048, %s198, %s187, 64, 64, 4
        $region28: #{tpu_custom_call.1} parent=19 // pred_fallthru
          _
      $region20: #{tpu_custom_call.1} parent=5 // pred_fallthru
        _
      %p204 = scmp.le.s32.totalorder 1, %s16
      %p205 = scmp.lt.s32.totalorder %s16, 5
      %p206 = pnand %p204, %p205
      %p207 = pneg %p206
      // Predicated region
      $region29: #{tpu_custom_call.1} parent=5 // pred_check
        _
      $region30: #{tpu_custom_call.1} parent=5 // pred_check_branch
        %209 = sbr.rel (%p206) target = $region32
      $region31: #{tpu_custom_call.1} parent=5 // pred_region
        %s210 = ssub.s32 %s16, 1
        %s211 = sand.u32 %s21, 1
        %s212 = scalar_lea.sflag [#allocation4], %s211
        %s213 = sand.u32 %s41, 1
        %s214 = smul.addr %s213, 32
        %s215 = scalar_lea.vmem [#allocation3], %s214
        // Predicated region
        $region33: #{tpu_custom_call.1} parent=31 // pred_check
          %p216 = pneg %p54
        $region34: #{tpu_custom_call.1} parent=31 // pred_check_branch
          %218 = sbr.rel (%p216) target = $region36
        $region35: #{tpu_custom_call.1} parent=31 // pred_region
          %219 = dma.done %s212, 512
        $region36: #{tpu_custom_call.1} parent=31 // pred_fallthru
          _
        // Predicated region
        $region37: #{tpu_custom_call.1} parent=31 // pred_check
          %p220 = pneg %p75
        $region38: #{tpu_custom_call.1} parent=31 // pred_check_branch
          %222 = sbr.rel (%p220) target = $region40
        $region39: #{tpu_custom_call.1} parent=31 // pred_region
          %223 = dma.done [#allocation7], 4096
        $region40: #{tpu_custom_call.1} parent=31 // pred_fallthru
          _
        %s224 = sand.u32 %s21, 1
        %s225 = scalar_lea.sflag [#allocation4], %s224
        %s226 = sand.u32 %s88, 1
        %s227 = smul.addr %s226, 128
        %s228 = scalar_lea.vmem [#allocation8], %s227
        // Predicated region
        $region41: #{tpu_custom_call.1} parent=31 // pred_check
          %p229 = pneg %p101
        $region42: #{tpu_custom_call.1} parent=31 // pred_check_branch
          %231 = sbr.rel (%p229) target = $region44
        $region43: #{tpu_custom_call.1} parent=31 // pred_region
          %232 = dma.done %s225, 2048
        $region44: #{tpu_custom_call.1} parent=31 // pred_fallthru
          _
        %s233 = sand.u32 %s21, 1
        %s234 = scalar_lea.sflag [#allocation4], %s233
        %s235 = sand.u32 %s41, 1
        %s236 = smul.addr %s235, 32
        %s237 = scalar_lea.vmem [#allocation3], %s236
        %p238 = pneg %p54
        %p239 = pneg %p51
        %p240 = pneg %p75
        %p241 = pneg %p72
        %s242 = sand.u32 %s21, 1
        %s243 = scalar_lea.sflag [#allocation4], %s242
        %s244 = sand.u32 %s88, 1
        %s245 = smul.addr %s244, 128
        %s246 = scalar_lea.vmem [#allocation8], %s245
        %p247 = pneg %p101
        %p248 = pneg %p98
        %p249 = pneg %p129
        %p250 = pneg %p126
        %s251 = sand.u32 %s116, 1
        %s252 = scalar_lea.sflag [#allocation5], %s251
        %s253 = sand.u32 %s116, 1
        %s254 = smul.addr %s253, 32
        %s255 = scalar_lea.vmem [#allocation9], %s254
        %s256 = smul.u32 2, %s25
        %s257 = smul.u32 32, %s26
        %s258 = smul.u32 2, %s25
        %s259 = smul.u32 2, %s26
        %p261 = scmp.eq.s32.totalorder %s26, 0
        // Predicated region
        $region45: #{tpu_custom_call.1} parent=31 // pred_check
          %p262 = pneg %p261
        $region46: #{tpu_custom_call.1} parent=31 // pred_check_branch
          %264 = sbr.rel (%p262) target = $region48
        $region47: #{tpu_custom_call.1} parent=31 // pred_region
          %v265 = vld [vmem:[%s215] sm:$0xff]
          %v266 = vld [vmem:[%s215 + $0x8] sm:$0xff]
          %v267 = vld [vmem:[%s215 + $0x10] sm:$0xff]
          %v268 = vld [vmem:[%s215 + $0x18] sm:$0xff]
          %v269 = vld [vmem:[#allocation6] sm:$0xff]
          %v270 = vld [vmem:[#allocation6 + $0x8] sm:$0xff]
          %v271 = vld [vmem:[#allocation6 + $0x10] sm:$0xff]
          %v272 = vld [vmem:[#allocation6 + $0x18] sm:$0xff]
          %v273 = vld [vmem:[#allocation6 + $0x20] sm:$0xff]
          %v274 = vld [vmem:[#allocation6 + $0x28] sm:$0xff]
          %v275 = vld [vmem:[#allocation6 + $0x30] sm:$0xff]
          %v276 = vld [vmem:[#allocation6 + $0x38] sm:$0xff]
          %v277 = vld [vmem:[#allocation6 + $0x40] sm:$0xff]
          %v278 = vld [vmem:[#allocation6 + $0x48] sm:$0xff]
          %v279 = vld [vmem:[#allocation6 + $0x50] sm:$0xff]
          %v280 = vld [vmem:[#allocation6 + $0x58] sm:$0xff]
          %v281 = vld [vmem:[#allocation6 + $0x60] sm:$0xff]
          %v282 = vld [vmem:[#allocation6 + $0x68] sm:$0xff]
          %v283 = vld [vmem:[#allocation6 + $0x70] sm:$0xff]
          %v284 = vld [vmem:[#allocation6 + $0x78] sm:$0xff]
          %v285 = vld [vmem:[#allocation6 + $0x80] sm:$0xff]
          %v286 = vld [vmem:[#allocation6 + $0x88] sm:$0xff]
          %v287 = vld [vmem:[#allocation6 + $0x90] sm:$0xff]
          %v288 = vld [vmem:[#allocation6 + $0x98] sm:$0xff]
          %v289 = vld [vmem:[#allocation6 + $0xa0] sm:$0xff]
          %v290 = vld [vmem:[#allocation6 + $0xa8] sm:$0xff]
          %v291 = vld [vmem:[#allocation6 + $0xb0] sm:$0xff]
          %v292 = vld [vmem:[#allocation6 + $0xb8] sm:$0xff]
          %v293 = vld [vmem:[#allocation6 + $0xc0] sm:$0xff]
          %v294 = vld [vmem:[#allocation6 + $0xc8] sm:$0xff]
          %v295 = vld [vmem:[#allocation6 + $0xd0] sm:$0xff]
          %v296 = vld [vmem:[#allocation6 + $0xd8] sm:$0xff]
          %v297 = vld [vmem:[#allocation6 + $0xe0] sm:$0xff]
          %v298 = vld [vmem:[#allocation6 + $0xe8] sm:$0xff]
          %v299 = vld [vmem:[#allocation6 + $0xf0] sm:$0xff]
          %v300 = vld [vmem:[#allocation6 + $0xf8] sm:$0xff]
          %v305 = vunpack.c.l.b16 %v265
          %v306 = vunpack.c.h.b16 %v265
          %v307 = vunpack.c.l.b16 %v266
          %v308 = vunpack.c.h.b16 %v266
          %v309 = vunpack.c.l.b16 %v267
          %v310 = vunpack.c.h.b16 %v267
          %v311 = vunpack.c.l.b16 %v268
          %v312 = vunpack.c.h.b16 %v268
          %v313 = vpack.c.b16 %v309, %v305
          %v314 = vpack.c.b16 %v310, %v306
          %v315 = vpack.c.b16 %v311, %v307
          %v316 = vpack.c.b16 %v312, %v308
          %v353 = vunpack.c.l.b16 %v269
          %v354 = vunpack.c.h.b16 %v269
          %v355 = vunpack.c.l.b16 %v270
          %v356 = vunpack.c.h.b16 %v270
          %v357 = vunpack.c.l.b16 %v271
          %v358 = vunpack.c.h.b16 %v271
          %v359 = vunpack.c.l.b16 %v272
          %v360 = vunpack.c.h.b16 %v272
          %v361 = vunpack.c.l.b16 %v273
          %v362 = vunpack.c.h.b16 %v273
          %v363 = vunpack.c.l.b16 %v274
          %v364 = vunpack.c.h.b16 %v274
          %v365 = vunpack.c.l.b16 %v275
          %v366 = vunpack.c.h.b16 %v275
          %v367 = vunpack.c.l.b16 %v276
          %v368 = vunpack.c.h.b16 %v276
          %v369 = vunpack.c.l.b16 %v277
          %v370 = vunpack.c.h.b16 %v277
          %v371 = vunpack.c.l.b16 %v278
          %v372 = vunpack.c.h.b16 %v278
          %v373 = vunpack.c.l.b16 %v279
          %v374 = vunpack.c.h.b16 %v279
          %v375 = vunpack.c.l.b16 %v280
          %v376 = vunpack.c.h.b16 %v280
          %v377 = vunpack.c.l.b16 %v281
          %v378 = vunpack.c.h.b16 %v281
          %v379 = vunpack.c.l.b16 %v282
          %v380 = vunpack.c.h.b16 %v282
          %v381 = vunpack.c.l.b16 %v283
          %v382 = vunpack.c.h.b16 %v283
          %v383 = vunpack.c.l.b16 %v284
          %v384 = vunpack.c.h.b16 %v284
          %v385 = vunpack.c.l.b16 %v285
          %v386 = vunpack.c.h.b16 %v285
          %v387 = vunpack.c.l.b16 %v286
          %v388 = vunpack.c.h.b16 %v286
          %v389 = vunpack.c.l.b16 %v287
          %v390 = vunpack.c.h.b16 %v287
          %v391 = vunpack.c.l.b16 %v288
          %v392 = vunpack.c.h.b16 %v288
          %v393 = vunpack.c.l.b16 %v289
          %v394 = vunpack.c.h.b16 %v289
          %v395 = vunpack.c.l.b16 %v290
          %v396 = vunpack.c.h.b16 %v290
          %v397 = vunpack.c.l.b16 %v291
          %v398 = vunpack.c.h.b16 %v291
          %v399 = vunpack.c.l.b16 %v292
          %v400 = vunpack.c.h.b16 %v292
          %v401 = vunpack.c.l.b16 %v293
          %v402 = vunpack.c.h.b16 %v293
          %v403 = vunpack.c.l.b16 %v294
          %v404 = vunpack.c.h.b16 %v294
          %v405 = vunpack.c.l.b16 %v295
          %v406 = vunpack.c.h.b16 %v295
          %v407 = vunpack.c.l.b16 %v296
          %v408 = vunpack.c.h.b16 %v296
          %v409 = vunpack.c.l.b16 %v297
          %v410 = vunpack.c.h.b16 %v297
          %v411 = vunpack.c.l.b16 %v298
          %v412 = vunpack.c.h.b16 %v298
          %v413 = vunpack.c.l.b16 %v299
          %v414 = vunpack.c.h.b16 %v299
          %v415 = vunpack.c.l.b16 %v300
          %v416 = vunpack.c.h.b16 %v300
          %v417 = vpack.c.b16 %v357, %v353
          %v418 = vpack.c.b16 %v358, %v354
          %v419 = vpack.c.b16 %v359, %v355
          %v420 = vpack.c.b16 %v360, %v356
          %v421 = vpack.c.b16 %v365, %v361
          %v422 = vpack.c.b16 %v366, %v362
          %v423 = vpack.c.b16 %v367, %v363
          %v424 = vpack.c.b16 %v368, %v364
          %v425 = vpack.c.b16 %v373, %v369
          %v426 = vpack.c.b16 %v374, %v370
          %v427 = vpack.c.b16 %v375, %v371
          %v428 = vpack.c.b16 %v376, %v372
          %v429 = vpack.c.b16 %v381, %v377
          %v430 = vpack.c.b16 %v382, %v378
          %v431 = vpack.c.b16 %v383, %v379
          %v432 = vpack.c.b16 %v384, %v380
          %v433 = vpack.c.b16 %v389, %v385
          %v434 = vpack.c.b16 %v390, %v386
          %v435 = vpack.c.b16 %v391, %v387
          %v436 = vpack.c.b16 %v392, %v388
          %v437 = vpack.c.b16 %v397, %v393
          %v438 = vpack.c.b16 %v398, %v394
          %v439 = vpack.c.b16 %v399, %v395
          %v440 = vpack.c.b16 %v400, %v396
          %v441 = vpack.c.b16 %v405, %v401
          %v442 = vpack.c.b16 %v406, %v402
          %v443 = vpack.c.b16 %v407, %v403
          %v444 = vpack.c.b16 %v408, %v404
          %v445 = vpack.c.b16 %v413, %v409
          %v446 = vpack.c.b16 %v414, %v410
          %v447 = vpack.c.b16 %v415, %v411
          %v448 = vpack.c.b16 %v416, %v412
          %481 = vmatprep.subr.bf16.mxu0 %v418
          %482 = vmatpush1.bf16.xpose.msra.mxu0 %v417
          %483 = vmatprep.subr.bf16.mxu0 %v422
          %484 = vmatpush1.bf16.xpose.msra.mxu0 %v421
          %485 = vmatprep.subr.bf16.mxu0 %v426
          %486 = vmatpush1.bf16.xpose.msra.mxu0 %v425
          %487 = vmatprep.subr.bf16.mxu0 %v430
          %488 = vmatpush1.bf16.xpose.msra.mxu0 %v429
          %489 = vmatprep.subr.bf16.mxu0 %v434
          %490 = vmatpush1.bf16.xpose.msra.mxu0 %v433
          %491 = vmatprep.subr.bf16.mxu0 %v438
          %492 = vmatpush1.bf16.xpose.msra.mxu0 %v437
          %493 = vmatprep.subr.bf16.mxu0 %v442
          %494 = vmatpush1.bf16.xpose.msra.mxu0 %v441
          %495 = vmatprep.subr.bf16.mxu0 %v446
          %496 = vmatpush1.bf16.xpose.msra.mxu0 %v445
          %497 = vmatprep.subr.bf16.mxu0 0
          %498 = vmatpush1.bf16.xpose.msra.mxu0 0
          %499 = vmatprep.subr.bf16.mxu0 0
          %500 = vmatpush1.bf16.xpose.msra.mxu0 0
          %501 = vmatprep.subr.bf16.mxu0 0
          %502 = vmatpush1.bf16.xpose.msra.mxu0 0
          %503 = vmatprep.subr.bf16.mxu0 0
          %504 = vmatpush1.bf16.xpose.msra.mxu0 0
          %505 = vmatprep.subr.bf16.mxu0 0
          %506 = vmatpush1.bf16.xpose.msra.mxu0 0
          %507 = vmatprep.subr.bf16.mxu0 0
          %508 = vmatpush1.bf16.xpose.msra.mxu0 0
          %509 = vmatprep.subr.bf16.mxu0 0
          %510 = vmatpush1.bf16.xpose.msra.mxu0 0
          %511 = vmatprep.subr.bf16.mxu0 0
          %512 = vmatpush1.bf16.xpose.msra.mxu0 0
          %513 = vmatprep.mubr.bf16.mxu0 %v314
          %514 = vmatmul.mubr.bf16.gmra.mrb[0].mxu0 %v313
          %v515 = vpop.f32.mrb[0].mxu0
          %v516 = vadd.f32 0.0, %v515
          %v517 = vpop.f32.mrb[0].mxu0
          %v518 = vpop.f32.mrb[0].mxu0
          %v519 = vadd.f32 0.0, %v518
          %v520 = vpop.f32.mrb[0].mxu0
          %521 = vdwg.mxu0
          %522 = vmatprep.subr.bf16.mxu0 %v420
          %523 = vmatpush1.bf16.xpose.msra.mxu0 %v419
          %524 = vmatprep.subr.bf16.mxu0 %v424
          %525 = vmatpush1.bf16.xpose.msra.mxu0 %v423
          %526 = vmatprep.subr.bf16.mxu0 %v428
          %527 = vmatpush1.bf16.xpose.msra.mxu0 %v427
          %528 = vmatprep.subr.bf16.mxu0 %v432
          %529 = vmatpush1.bf16.xpose.msra.mxu0 %v431
          %530 = vmatprep.subr.bf16.mxu0 %v436
          %531 = vmatpush1.bf16.xpose.msra.mxu0 %v435
          %532 = vmatprep.subr.bf16.mxu0 %v440
          %533 = vmatpush1.bf16.xpose.msra.mxu0 %v439
          %534 = vmatprep.subr.bf16.mxu0 %v444
          %535 = vmatpush1.bf16.xpose.msra.mxu0 %v443
          %536 = vmatprep.subr.bf16.mxu0 %v448
          %537 = vmatpush1.bf16.xpose.msra.mxu0 %v447
          %538 = vmatprep.subr.bf16.mxu0 0
          %539 = vmatpush1.bf16.xpose.msra.mxu0 0
          %540 = vmatprep.subr.bf16.mxu0 0
          %541 = vmatpush1.bf16.xpose.msra.mxu0 0
          %542 = vmatprep.subr.bf16.mxu0 0
          %543 = vmatpush1.bf16.xpose.msra.mxu0 0
          %544 = vmatprep.subr.bf16.mxu0 0
          %545 = vmatpush1.bf16.xpose.msra.mxu0 0
          %546 = vmatprep.subr.bf16.mxu0 0
          %547 = vmatpush1.bf16.xpose.msra.mxu0 0
          %548 = vmatprep.subr.bf16.mxu0 0
          %549 = vmatpush1.bf16.xpose.msra.mxu0 0
          %550 = vmatprep.subr.bf16.mxu0 0
          %551 = vmatpush1.bf16.xpose.msra.mxu0 0
          %552 = vmatprep.subr.bf16.mxu0 0
          %553 = vmatpush1.bf16.xpose.msra.mxu0 0
          %554 = vmatprep.mubr.bf16.mxu0 %v316
          %555 = vmatmul.mubr.bf16.gmra.mrb[0].mxu0 %v315
          %v556 = vpop.f32.mrb[0].mxu0
          %v557 = vadd.f32 %v516, %v556
          %v558 = vpop.f32.mrb[0].mxu0
          %v559 = vpop.f32.mrb[0].mxu0
          %v560 = vadd.f32 %v519, %v559
          %v561 = vpop.f32.mrb[0].mxu0
          %562 = vdwg.mxu0
          %v563 = vpack.c.bf16 %v560, %v557
          %564 = vst [vmem:[#allocation2] sm:$0xff] %v563
        $region48: #{tpu_custom_call.1} parent=31 // pred_fallthru
          _
        %v565 = vld [vmem:[#allocation2] sm:$0xff]
        %v566 = vld [vmem:[%s228] sm:$0xf]
        %v567 = vld [vmem:[%s228 + $0x4] sm:$0xf]
        %v568 = vld [vmem:[%s228 + $0x8] sm:$0xf]
        %v569 = vld [vmem:[%s228 + $0xc] sm:$0xf]
        %v570 = vld [vmem:[%s228 + $0x10] sm:$0xf]
        %v571 = vld [vmem:[%s228 + $0x14] sm:$0xf]
        %v572 = vld [vmem:[%s228 + $0x18] sm:$0xf]
        %v573 = vld [vmem:[%s228 + $0x1c] sm:$0xf]
        %v574 = vld [vmem:[%s228 + $0x20] sm:$0xf]
        %v575 = vld [vmem:[%s228 + $0x24] sm:$0xf]
        %v576 = vld [vmem:[%s228 + $0x28] sm:$0xf]
        %v577 = vld [vmem:[%s228 + $0x2c] sm:$0xf]
        %v578 = vld [vmem:[%s228 + $0x30] sm:$0xf]
        %v579 = vld [vmem:[%s228 + $0x34] sm:$0xf]
        %v580 = vld [vmem:[%s228 + $0x38] sm:$0xf]
        %v581 = vld [vmem:[%s228 + $0x3c] sm:$0xf]
        %v582 = vld [vmem:[%s228 + $0x40] sm:$0xf]
        %v583 = vld [vmem:[%s228 + $0x44] sm:$0xf]
        %v584 = vld [vmem:[%s228 + $0x48] sm:$0xf]
        %v585 = vld [vmem:[%s228 + $0x4c] sm:$0xf]
        %v586 = vld [vmem:[%s228 + $0x50] sm:$0xf]
        %v587 = vld [vmem:[%s228 + $0x54] sm:$0xf]
        %v588 = vld [vmem:[%s228 + $0x58] sm:$0xf]
        %v589 = vld [vmem:[%s228 + $0x5c] sm:$0xf]
        %v590 = vld [vmem:[%s228 + $0x60] sm:$0xf]
        %v591 = vld [vmem:[%s228 + $0x64] sm:$0xf]
        %v592 = vld [vmem:[%s228 + $0x68] sm:$0xf]
        %v593 = vld [vmem:[%s228 + $0x6c] sm:$0xf]
        %v594 = vld [vmem:[%s228 + $0x70] sm:$0xf]
        %v595 = vld [vmem:[%s228 + $0x74] sm:$0xf]
        %v596 = vld [vmem:[%s228 + $0x78] sm:$0xf]
        %v597 = vld [vmem:[%s228 + $0x7c] sm:$0xf]
        %v630 = vunpack.c.l.b16 %v566
        %v631 = vunpack.c.l.b16 %v567
        %v632 = vunpack.c.l.b16 %v568
        %v633 = vunpack.c.l.b16 %v569
        %v634 = vunpack.c.l.b16 %v570
        %v635 = vunpack.c.l.b16 %v571
        %v636 = vunpack.c.l.b16 %v572
        %v637 = vunpack.c.l.b16 %v573
        %v638 = vunpack.c.l.b16 %v574
        %v639 = vunpack.c.l.b16 %v575
        %v640 = vunpack.c.l.b16 %v576
        %v641 = vunpack.c.l.b16 %v577
        %v642 = vunpack.c.l.b16 %v578
        %v643 = vunpack.c.l.b16 %v579
        %v644 = vunpack.c.l.b16 %v580
        %v645 = vunpack.c.l.b16 %v581
        %v646 = vunpack.c.l.b16 %v582
        %v647 = vunpack.c.l.b16 %v583
        %v648 = vunpack.c.l.b16 %v584
        %v649 = vunpack.c.l.b16 %v585
        %v650 = vunpack.c.l.b16 %v586
        %v651 = vunpack.c.l.b16 %v587
        %v652 = vunpack.c.l.b16 %v588
        %v653 = vunpack.c.l.b16 %v589
        %v654 = vunpack.c.l.b16 %v590
        %v655 = vunpack.c.l.b16 %v591
        %v656 = vunpack.c.l.b16 %v592
        %v657 = vunpack.c.l.b16 %v593
        %v658 = vunpack.c.l.b16 %v594
        %v659 = vunpack.c.l.b16 %v595
        %v660 = vunpack.c.l.b16 %v596
        %v661 = vunpack.c.l.b16 %v597
        %v662 = vpack.c.b16 %v631, %v630
        %v663 = vpack.c.b16 %v633, %v632
        %v664 = vpack.c.b16 %v635, %v634
        %v665 = vpack.c.b16 %v637, %v636
        %v666 = vpack.c.b16 %v639, %v638
        %v667 = vpack.c.b16 %v641, %v640
        %v668 = vpack.c.b16 %v643, %v642
        %v669 = vpack.c.b16 %v645, %v644
        %v670 = vpack.c.b16 %v647, %v646
        %v671 = vpack.c.b16 %v649, %v648
        %v672 = vpack.c.b16 %v651, %v650
        %v673 = vpack.c.b16 %v653, %v652
        %v674 = vpack.c.b16 %v655, %v654
        %v675 = vpack.c.b16 %v657, %v656
        %v676 = vpack.c.b16 %v659, %v658
        %v677 = vpack.c.b16 %v661, %v660
        %694 = vmatprep.subr.bf16.mxu0 0
        %695 = vmatpush1.bf16.xpose.msra.mxu0 %v662
        %696 = vmatprep.subr.bf16.mxu0 0
        %697 = vmatpush1.bf16.xpose.msra.mxu0 %v663
        %698 = vmatprep.subr.bf16.mxu0 0
        %699 = vmatpush1.bf16.xpose.msra.mxu0 %v664
        %700 = vmatprep.subr.bf16.mxu0 0
        %701 = vmatpush1.bf16.xpose.msra.mxu0 %v665
        %702 = vmatprep.subr.bf16.mxu0 0
        %703 = vmatpush1.bf16.xpose.msra.mxu0 %v666
        %704 = vmatprep.subr.bf16.mxu0 0
        %705 = vmatpush1.bf16.xpose.msra.mxu0 %v667
        %706 = vmatprep.subr.bf16.mxu0 0
        %707 = vmatpush1.bf16.xpose.msra.mxu0 %v668
        %708 = vmatprep.subr.bf16.mxu0 0
        %709 = vmatpush1.bf16.xpose.msra.mxu0 %v669
        %710 = vmatprep.subr.bf16.mxu0 0
        %711 = vmatpush1.bf16.xpose.msra.mxu0 %v670
        %712 = vmatprep.subr.bf16.mxu0 0
        %713 = vmatpush1.bf16.xpose.msra.mxu0 %v671
        %714 = vmatprep.subr.bf16.mxu0 0
        %715 = vmatpush1.bf16.xpose.msra.mxu0 %v672
        %716 = vmatprep.subr.bf16.mxu0 0
        %717 = vmatpush1.bf16.xpose.msra.mxu0 %v673
        %718 = vmatprep.subr.bf16.mxu0 0
        %719 = vmatpush1.bf16.xpose.msra.mxu0 %v674
        %720 = vmatprep.subr.bf16.mxu0 0
        %721 = vmatpush1.bf16.xpose.msra.mxu0 %v675
        %722 = vmatprep.subr.bf16.mxu0 0
        %723 = vmatpush1.bf16.xpose.msra.mxu0 %v676
        %724 = vmatprep.subr.bf16.mxu0 0
        %725 = vmatpush1.bf16.xpose.msra.mxu0 %v677
        %726 = vmatprep.mubr.bf16.mxu0 0
        %727 = vmatmul.mubr.bf16.gmra.mrb[0].mxu0 %v565
        %v728 = vpop.f32.mrb[0].mxu0
        %v729 = vadd.f32 0.0, %v728
        %v730 = vpop.f32.mrb[0].mxu0
        %v731 = vadd.f32 0.0, %v730
        %v732 = vpop.f32.mrb[0].mxu0
        %v733 = vadd.f32 0.0, %v732
        %v734 = vpop.f32.mrb[0].mxu0
        %v735 = vadd.f32 0.0, %v734
        %736 = vdwg.mxu0
        %737 = vst [vmem:[%s255] sm:$0xff] %v729
        %738 = vst [vmem:[%s255 + $0x8] sm:$0xff] %v731
        %739 = vst [vmem:[%s255 + $0x10] sm:$0xff] %v733
        %740 = vst [vmem:[%s255 + $0x18] sm:$0xff] %v735
        %s741 = sand.u32 %s116, 1
        %s742 = scalar_lea.sflag [#allocation5], %s741
        %s743 = sand.u32 %s116, 1
        %s744 = smul.addr %s743, 32
        %s745 = scalar_lea.vmem [#allocation9], %s744
        // Predicated region
        $region49: #{tpu_custom_call.1} parent=31 // pred_check
          %p746 = pneg %p126
        $region50: #{tpu_custom_call.1} parent=31 // pred_check_branch
          %748 = sbr.rel (%p746) target = $region52
        $region51: #{tpu_custom_call.1} parent=31 // pred_region
          %s749 = smul.u32 2, %s25
          %s750 = smul.u32 2, %s26
          %s752 = ssub.s32 512, 512
          %753 = vsyncadd %s742, %s752
          %s754 = smul.addr %s749, 4
          %s755 = sadd.s32 %s750, %s754
          %s756 = smul.addr %s755, 128
          %s757 = scalar_lea.hbm %s3, %s756
          %s758 = sshll.u32 %s745, 4
          %s759 = int_to_ptr.vmem [resolvable:$true] %s758
          %764 = dma.vmem_to_hbm [thread:$0]  %s759, 512, %s757, %s742, 256, 512, 16
        $region52: #{tpu_custom_call.1} parent=31 // pred_fallthru
          _
      $region32: #{tpu_custom_call.1} parent=5 // pred_fallthru
        _
      %p765 = scmp.le.s32.totalorder 2, %s16
      // Predicated region
      $region53: #{tpu_custom_call.1} parent=5 // pred_check
        %p766 = pneg %p765
      $region54: #{tpu_custom_call.1} parent=5 // pred_check_branch
        %768 = sbr.rel (%p766) target = $region56
      $region55: #{tpu_custom_call.1} parent=5 // pred_region
        %s769 = ssub.s32 %s16, 2
        // Predicated region
        $region57: #{tpu_custom_call.1} parent=55 // pred_check
          %p770 = pneg %p132
        $region58: #{tpu_custom_call.1} parent=55 // pred_check_branch
          %772 = sbr.rel (%p770) target = $region60
        $region59: #{tpu_custom_call.1} parent=55 // pred_region
          %s773 = sand.u32 %s117, 1
          %s774 = scalar_lea.sflag [#allocation5], %s773
          %s775 = sand.u32 %s117, 1
          %s776 = smul.addr %s775, 32
          %s777 = scalar_lea.vmem [#allocation9], %s776
          %778 = dma.done %s774, 512
        $region60: #{tpu_custom_call.1} parent=55 // pred_fallthru
          _
      $region56: #{tpu_custom_call.1} parent=5 // pred_fallthru
        _
    $region6: #{tpu_custom_call.1} parent=1 // loop_footer
      %s20 = sadd.s32 1, %s16
    $region7: #{tpu_custom_call.1} parent=1 // loop_footer_branch
      %15 = sbr.rel target = $region3
    $region8: #{tpu_custom_call.1} parent=1 // loop_exit
      _
    %779 = vsyncpa [#allocation4], 1
    %s780 = scalar_lea.sflag [#allocation4], 1
    %781 = vsyncpa %s780, 1
    %782 = vsyncpa [#allocation7], 1
    %783 = vsyncpa [#allocation5], 1
    %s784 = scalar_lea.sflag [#allocation5], 1
    %785 = vsyncpa %s784, 1

</llo_original>
